<compile_context>
chip_gen: v6e
topology: v6e:2x2x1
jax: 0.10.0
libtpu: 0.0.40
codegen_flags: <defaults>
</compile_context>

<pallas_src>
import math
import functools

import jax
import jax.numpy as jnp
from jax.experimental import pallas as pl
from jax.experimental.pallas import tpu as pltpu

LN_EPS = 1e-12  # BertLayerNorm epsilon


# ---------------------------------------------------------------------------
# In-kernel math helpers (pure functions on jnp values)
# ---------------------------------------------------------------------------

def _layernorm(y, g, b):
    # LayerNorm over the last (hidden) axis in f32; rsqrt goes to the EUP slot.
    mu = jnp.mean(y, axis=-1, keepdims=True)
    var = jnp.mean(jnp.square(y - mu), axis=-1, keepdims=True)
    return (y - mu) * jax.lax.rsqrt(var + LN_EPS) * g + b


def _erf(x):
    # Abramowitz & Stegun 7.1.26 polynomial approximation (|err| < 1.5e-7),
    # built from exp/mul/add/where only -> guaranteed Mosaic lowering.
    a1, a2, a3, a4, a5 = 0.254829592, -0.284496736, 1.421413741, -1.453152027, 1.061405429
    pconst = 0.3275911
    z = jnp.abs(x)
    t = 1.0 / (1.0 + pconst * z)
    poly = t * (a1 + t * (a2 + t * (a3 + t * (a4 + t * a5))))
    e = 1.0 - poly * jnp.exp(-z * z)
    return jnp.where(x >= 0, e, -e)


def _gelu(x):
    # Exact-erf BERT GELU (to approximation accuracy ~1e-7).
    return 0.5 * x * (1.0 + _erf(x * (1.0 / math.sqrt(2.0))))


# ---------------------------------------------------------------------------
# Pallas kernels
# ---------------------------------------------------------------------------

def _ln_kernel(x_ref, g_ref, b_ref, o_ref):
    o_ref[...] = _layernorm(x_ref[...], g_ref[...], b_ref[...]).astype(o_ref.dtype)


def layernorm(x, g, b):
    # Embedding LayerNorm on the flattened [B*S, H] view (tiny; single block).
    n, h = x.shape
    return pl.pallas_call(
        _ln_kernel,
        out_shape=jax.ShapeDtypeStruct((n, h), x.dtype),
        grid=(1,),
        in_specs=[
            pl.BlockSpec((n, h), lambda i: (0, 0)),
            pl.BlockSpec((1, h), lambda i: (0, 0)),
            pl.BlockSpec((1, h), lambda i: (0, 0)),
        ],
        out_specs=pl.BlockSpec((n, h), lambda i: (0, 0)),
    )(x, g.reshape(1, h), b.reshape(1, h))


def _encoder_layer_kernel(h_ref, mask_ref,
                          wqkv_ref, bqkv_ref,
                          wo_ref, bo_ref, ln1_g_ref, ln1_b_ref,
                          wi_ref, bi_ref, wo2_ref, bo2_ref,
                          ln2_g_ref, ln2_b_ref,
                          o_ref, ctx_ref, *, num_heads, head_dim):
    """One grid step = one batch element. Whole encoder layer, weights in VMEM."""
    scale = 1.0 / math.sqrt(head_dim)
    H = num_heads * head_dim

    x = h_ref[0]                                   # (S, H) f32 residual input
    mask_add = mask_ref[0]                         # (1, S) f32 additive mask

    # ---- fused Q|K|V projection: bf16 MXU operands, f32 accumulation ----
    xb = x.astype(jnp.bfloat16)
    qkv = jnp.dot(xb, wqkv_ref[...].astype(jnp.bfloat16),
                  preferred_element_type=jnp.float32) + bqkv_ref[...]   # (S, 3H) f32
    q = qkv[:, 0:H]
    k = qkv[:, H:2 * H]
    v = qkv[:, 2 * H:3 * H]

    # ---- per-head attention, heads sliced in-kernel, results into VMEM scratch ----
    for hd in range(num_heads):
        lo = hd * head_dim
        qh = q[:, lo:lo + head_dim].astype(jnp.bfloat16)
        kh = k[:, lo:lo + head_dim].astype(jnp.bfloat16)
        vh = v[:, lo:lo + head_dim].astype(jnp.bfloat16)
        s = jnp.dot(qh, kh.T, preferred_element_type=jnp.float32) * scale + mask_add
        s = s - jnp.max(s, axis=-1, keepdims=True)
        p = jnp.exp(s)
        p = p * pl.reciprocal(jnp.sum(p, axis=-1, keepdims=True), approx=True)
        ctx_ref[:, lo:lo + head_dim] = jnp.dot(
            p.astype(jnp.bfloat16), vh, preferred_element_type=jnp.float32)
    ctx = ctx_ref[...]                             # (S, H) f32, heads merged in place

    # ---- attention output projection + bias + Add & LayerNorm (fused epilogue) ----
    attn_out = jnp.dot(ctx.astype(jnp.bfloat16), wo_ref[...].astype(jnp.bfloat16),
                       preferred_element_type=jnp.float32) + bo_ref[...]
    h1 = _layernorm(attn_out + x, ln1_g_ref[...], ln1_b_ref[...])

    # ---- feed-forward: bias + exact-erf GELU fused, then bias + Add & LN fused ----
    inter = jnp.dot(h1.astype(jnp.bfloat16), wi_ref[...].astype(jnp.bfloat16),
                    preferred_element_type=jnp.float32) + bi_ref[...]
    inter = _gelu(inter)
    ffn = jnp.dot(inter.astype(jnp.bfloat16), wo2_ref[...].astype(jnp.bfloat16),
                  preferred_element_type=jnp.float32) + bo2_ref[...]
    o_ref[0] = _layernorm(ffn + h1, ln2_g_ref[...], ln2_b_ref[...]).astype(o_ref.dtype)


def encoder_layer(h, extmask, lp, *, num_heads):
    """Fused BERT encoder layer. h: [B, S, H]; extmask: [B, 1, S] additive mask."""
    B, S, H = h.shape
    I = lp["wi"].shape[1]
    head_dim = H // num_heads

    # Q/K/V fused into a single [H, 3H] weight / [3H] bias.
    wqkv = jnp.concatenate([lp["wq"], lp["wk"], lp["wv"]], axis=1)
    bqkv = jnp.concatenate([lp["bq"], lp["bk"], lp["bv"]]).reshape(1, 3 * H)

    def rep(shape):
        # Grid-invariant (replicated) weight spec: same block every step ->
        # DMA'd once, stays resident in VMEM across the batch grid.
        return pl.BlockSpec(shape, lambda b: (0,) * len(shape))

    kern = functools.partial(_encoder_layer_kernel,
                             num_heads=num_heads, head_dim=head_dim)

    # TODO(synk): at real BERT sizes (H=768, S=512+) tile the matmuls over
    # (M, N, K) grid axes instead of whole-operand blocks so VMEM (64 MiB on
    # v7x) is respected and DMA is pipelined; at this toy size whole-operand
    # blocks already fit trivially.
    return pl.pallas_call(
        kern,
        out_shape=jax.ShapeDtypeStruct((B, S, H), h.dtype),
        grid=(B,),
        in_specs=[
            pl.BlockSpec((1, S, H), lambda b: (b, 0, 0)),   # activations, per batch
            pl.BlockSpec((1, 1, S), lambda b: (b, 0, 0)),   # additive mask, per batch
            rep((H, 3 * H)), rep((1, 3 * H)),               # fused QKV
            rep((H, H)), rep((1, H)),                       # attn output proj
            rep((1, H)), rep((1, H)),                       # LN1 gamma/beta
            rep((H, I)), rep((1, I)),                       # FFN in
            rep((I, H)), rep((1, H)),                       # FFN out
            rep((1, H)), rep((1, H)),                       # LN2 gamma/beta
        ],
        out_specs=pl.BlockSpec((1, S, H), lambda b: (b, 0, 0)),
        scratch_shapes=[pltpu.VMEM((S, H), jnp.float32)],   # merged-heads context
        compiler_params=pltpu.CompilerParams(
            dimension_semantics=("parallel",)),
    )(h, extmask, wqkv, bqkv,
      lp["wo"], lp["bo"].reshape(1, H),
      lp["ln1_g"].reshape(1, H), lp["ln1_b"].reshape(1, H),
      lp["wi"], lp["bi"].reshape(1, I),
      lp["wo2"], lp["bo2"].reshape(1, H),
      lp["ln2_g"].reshape(1, H), lp["ln2_b"].reshape(1, H))


# ---------------------------------------------------------------------------
# Parameter construction (deterministic synthetic "pretrained" weights)
# ---------------------------------------------------------------------------

def init_bert_params(key, *, vocab=100, hidden=32, num_layers=2, heads=4,
                     intermediate=64, max_pos=64, type_vocab=2):
    def nrm(k, shape):
        return (jax.random.normal(k, shape) * 0.02).astype(jnp.float32)

    keys = jax.random.split(key, 3 + num_layers)
    params = {
        "word_emb": nrm(keys[0], (vocab, hidden)),
        "pos_emb": nrm(keys[1], (max_pos, hidden)),
        "type_emb": nrm(keys[2], (type_vocab, hidden)),
        "emb_ln_g": jnp.ones((hidden,), jnp.float32),
        "emb_ln_b": jnp.zeros((hidden,), jnp.float32),
        "layers": [],
        "config": dict(hidden=hidden, heads=heads, intermediate=intermediate),
    }
    for l in range(num_layers):
        lk = jax.random.split(keys[3 + l], 6)
        params["layers"].append({
            "wq": nrm(lk[0], (hidden, hidden)), "bq": jnp.zeros((hidden,), jnp.float32),
            "wk": nrm(lk[1], (hidden, hidden)), "bk": jnp.zeros((hidden,), jnp.float32),
            "wv": nrm(lk[2], (hidden, hidden)), "bv": jnp.zeros((hidden,), jnp.float32),
            "wo": nrm(lk[3], (hidden, hidden)), "bo": jnp.zeros((hidden,), jnp.float32),
            "ln1_g": jnp.ones((hidden,), jnp.float32), "ln1_b": jnp.zeros((hidden,), jnp.float32),
            "wi": nrm(lk[4], (hidden, intermediate)), "bi": jnp.zeros((intermediate,), jnp.float32),
            "wo2": nrm(lk[5], (intermediate, hidden)), "bo2": jnp.zeros((hidden,), jnp.float32),
            "ln2_g": jnp.ones((hidden,), jnp.float32), "ln2_b": jnp.zeros((hidden,), jnp.float32),
        })
    return params


# ---------------------------------------------------------------------------
# Forward pass (equivalent of Bert.forward: returns top_vec = last layer)
# ---------------------------------------------------------------------------

def bert_forward(params, x, segs, mask):
    B, S = x.shape
    cfg = params["config"]
    H, nH = cfg["hidden"], cfg["heads"]

    # ---- embeddings (gathers stay as JAX glue; LayerNorm is a Pallas kernel) ----
    word = params["word_emb"][x]                                  # [B, S, H]
    pos = params["pos_emb"][jnp.arange(S)][None, :, :]            # [1, S, H]
    typ = params["type_emb"][segs]                                # [B, S, H]
    emb = (word + typ + pos).reshape(B * S, H)
    h = layernorm(emb, params["emb_ln_g"], params["emb_ln_b"]).reshape(B, S, H)

    # ---- extended attention mask: (1 - mask) * -10000, shape [B,1,S] (f32) ----
    extmask = ((1.0 - mask.astype(jnp.float32)) * -10000.0)[:, None, :]

    # ---- encoder stack: one fused Pallas kernel per layer ----
    for lp in params["layers"]:
        h = encoder_layer(h, extmask, lp, num_heads=nH)

    return h   # top_vec [B, S, H]


# ---------------------------------------------------------------------------
# Main
# ---------------------------------------------------------------------------

if __name__ == "__main__":
    B, S = 2, 8
    VOCAB = 100

    key = jax.random.PRNGKey(0)
    k_param, k_x, k_seg = jax.random.split(key, 3)

    params = init_bert_params(k_param, vocab=VOCAB, hidden=32, num_layers=2,
                              heads=4, intermediate=64, max_pos=64, type_vocab=2)

    x = jax.random.randint(k_x, (B, S), 0, VOCAB, dtype=jnp.int32)          # token ids
    segs = jax.random.randint(k_seg, (B, S), 0, 2, dtype=jnp.int32)          # segment ids
    mask = jnp.array([[1, 1, 1, 1, 1, 1, 0, 0],
                      [1, 1, 1, 1, 1, 1, 1, 1]], dtype=jnp.int32)            # attention mask

    top_vec = bert_forward(params, x, segs, mask)
    top_vec = jax.block_until_ready(top_vec)

    assert top_vec.shape == (B, S, 32) and top_vec.dtype == jnp.float32
    assert bool(jnp.all(jnp.isfinite(top_vec)))
    print("KERNEL_OK")
</pallas_src>

<mosaic_0001>
module attributes {stable_mosaic.version = 11 : i64} {
  func.func @_ln_kernel(%arg0: i32, %arg1: memref<16x32xf32, #tpu.memory_space<vmem>>, %arg2: memref<1x32xf32, #tpu.memory_space<vmem>>, %arg3: memref<1x32xf32, #tpu.memory_space<vmem>>, %arg4: memref<16x32xf32, #tpu.memory_space<vmem>>) attributes {dimension_semantics = [#tpu.dimension_semantics<arbitrary>], iteration_bounds = array<i64: 1>, scalar_prefetch = 0 : i64, scratch_operands = 0 : i64, tpu.core_type = #tpu.core_type<tc>, window_params = [{pipeline_mode = #tpu.pipeline_mode<synchronous>, transform_indices = @transform_0, window_bounds = array<i64: 16, 32>}, {pipeline_mode = #tpu.pipeline_mode<synchronous>, transform_indices = @transform_1, window_bounds = array<i64: 1, 32>}, {pipeline_mode = #tpu.pipeline_mode<synchronous>, transform_indices = @transform_2, window_bounds = array<i64: 1, 32>}, {pipeline_mode = #tpu.pipeline_mode<synchronous>, transform_indices = @transform_3, window_bounds = array<i64: 16, 32>}]} {
    %c0 = arith.constant 0 : index
    %c0_0 = arith.constant 0 : index
    %0 = vector.load %arg1[%c0, %c0_0] : memref<16x32xf32, #tpu.memory_space<vmem>>, vector<16x32xf32>
    %c0_1 = arith.constant 0 : index
    %c0_2 = arith.constant 0 : index
    %1 = vector.load %arg2[%c0_1, %c0_2] : memref<1x32xf32, #tpu.memory_space<vmem>>, vector<1x32xf32>
    %c0_3 = arith.constant 0 : index
    %c0_4 = arith.constant 0 : index
    %2 = vector.load %arg3[%c0_3, %c0_4] : memref<1x32xf32, #tpu.memory_space<vmem>>, vector<1x32xf32>
    %cst = arith.constant dense<0.000000e+00> : vector<16xf32>
    %3 = vector.multi_reduction <add>, %0, %cst [1] : vector<16x32xf32> to vector<16xf32>
    %4 = vector.shape_cast %3 : vector<16xf32> to vector<16x1xf32>
    %cst_5 = arith.constant 3.200000e+01 : f32
    %5 = vector.broadcast %cst_5 : f32 to vector<16x1xf32>
    %6 = arith.divf %4, %5 : vector<16x1xf32>
    %7 = vector.broadcast %6 : vector<16x1xf32> to vector<16x32xf32>
    %8 = arith.subf %0, %7 : vector<16x32xf32>
    %9 = arith.mulf %8, %8 : vector<16x32xf32>
    %cst_6 = arith.constant dense<0.000000e+00> : vector<16xf32>
    %10 = vector.multi_reduction <add>, %9, %cst_6 [1] : vector<16x32xf32> to vector<16xf32>
    %11 = vector.shape_cast %10 : vector<16xf32> to vector<16x1xf32>
    %cst_7 = arith.constant 3.200000e+01 : f32
    %12 = vector.broadcast %cst_7 : f32 to vector<16x1xf32>
    %13 = arith.divf %11, %12 : vector<16x1xf32>
    %14 = vector.broadcast %6 : vector<16x1xf32> to vector<16x32xf32>
    %15 = arith.subf %0, %14 : vector<16x32xf32>
    %cst_8 = arith.constant 9.99999996E-13 : f32
    %16 = vector.broadcast %cst_8 : f32 to vector<16x1xf32>
    %17 = arith.addf %13, %16 : vector<16x1xf32>
    %18 = math.rsqrt %17 : vector<16x1xf32>
    %19 = vector.broadcast %18 : vector<16x1xf32> to vector<16x32xf32>
    %20 = arith.mulf %15, %19 : vector<16x32xf32>
    %21 = vector.broadcast %1 : vector<1x32xf32> to vector<16x32xf32>
    %22 = arith.mulf %20, %21 : vector<16x32xf32>
    %23 = vector.broadcast %2 : vector<1x32xf32> to vector<16x32xf32>
    %24 = arith.addf %22, %23 : vector<16x32xf32>
    %c0_9 = arith.constant 0 : index
    %c0_10 = arith.constant 0 : index
    %25 = vector.load %arg4[%c0_9, %c0_10] : memref<16x32xf32, #tpu.memory_space<vmem>>, vector<16x32xf32>
    tpu.vector_store %arg4[%c0_9, %c0_10], %24 {strides = array<i32>} : memref<16x32xf32, #tpu.memory_space<vmem>>, vector<16x32xf32>,
    return
  }
  func.func @transform_0(%arg0: i32) -> (i32, i32) {
    %c0_i32 = arith.constant 0 : i32
    %c0_i32_0 = arith.constant 0 : i32
    %c0_i32_1 = arith.constant 0 : i32
    return %c0_i32, %c0_i32_0 : i32, i32
  }
  func.func @transform_1(%arg0: i32) -> (i32, i32) {
    %c0_i32 = arith.constant 0 : i32
    %c0_i32_0 = arith.constant 0 : i32
    %c0_i32_1 = arith.constant 0 : i32
    return %c0_i32, %c0_i32_0 : i32, i32
  }
  func.func @transform_2(%arg0: i32) -> (i32, i32) {
    %c0_i32 = arith.constant 0 : i32
    %c0_i32_0 = arith.constant 0 : i32
    %c0_i32_1 = arith.constant 0 : i32
    return %c0_i32, %c0_i32_0 : i32, i32
  }
  func.func @transform_3(%arg0: i32) -> (i32, i32) {
    %c0_i32 = arith.constant 0 : i32
    %c0_i32_0 = arith.constant 0 : i32
    %c0_i32_1 = arith.constant 0 : i32
    return %c0_i32, %c0_i32_0 : i32, i32
  }
}

</mosaic_0001>

<llo_original>
// kernel: tpu_custom_call.1
$region0: #{tpu_custom_call.1}
  #allocation0 [shape = 'u32[]', space=smem, size = 0x4, offset = 0x4, fixed_abs, tag = 'smem constant byte address 0x4 - core index']
  #allocation1 [shape = 'u32[144,128]{1,0:T(1,128)}', space=vmem, size = 0x12000, scoped, tag = 'internal scratch']
  %s0 = inlined_call_operand.hbm [shape: f32[16,32], index: 0, kind: input, shape index: {}]
  %s1 = inlined_call_operand.vmem [shape: f32[1,32], index: 1, kind: input, shape index: {}]
  %s2 = inlined_call_operand.vmem [shape: f32[1,32], index: 2, kind: input, shape index: {}]
  %s3 = inlined_call_operand.hbm [shape: f32[16,32], index: 3, kind: output, shape index: {}]
  %s4 = sld [smem:[#allocation0]]
  $region26: #{tpu_custom_call.1} parent=0
    _
  %s6 = ssub.s32 1, %s4
  %s7 = scalar_select 0, %s6, %s4
  $region1: #{tpu_custom_call.1} parent=0
    #allocation2 [shape = 'u8[8192]{0}', space=vmem, size = 0x2000, scoped, tag = 'input window, operand 0, single buffered']
    #allocation3 [shape = 's32[1]{0}', space=sflag, size = 0x4, scoped, tag = 'scoped memory for tpu_custom_call.1']
    #allocation4 [shape = 's32[1]{0}', space=sflag, size = 0x4, scoped, tag = 'scoped memory for tpu_custom_call.1']
    #allocation5 [shape = 'u8[8192]{0}', space=vmem, size = 0x2000, scoped, tag = 'output window, operand 0, single buffered']
    %8 = vsyncpa [#allocation3], 0
    %9 = vsyncpa [#allocation4], 0
    // Predicated region
    $region2: #{tpu_custom_call.1} parent=1 // pred_check
      _
    $region3: #{tpu_custom_call.1} parent=1 // pred_check_branch
      %11 = sbr.rel (0) target = $region5
    $region4: #{tpu_custom_call.1} parent=1 // pred_region
      %s13 = ssub.s32 256, 256
      %14 = vsyncadd [#allocation3], %s13
      %s15 = sshll.u32 [#allocation2], 4
      %s16 = int_to_ptr.vmem [resolvable:$true] %s15
      %21 = dma.hbm_to_vmem [thread:$0]  %s0, 256, %s16, [#allocation3], 128, 128, 8
    $region5: #{tpu_custom_call.1} parent=1 // pred_fallthru
      _
    // Predicated region
    $region6: #{tpu_custom_call.1} parent=1 // pred_check
      _
    $region7: #{tpu_custom_call.1} parent=1 // pred_check_branch
      %23 = sbr.rel (0) target = $region9
    $region8: #{tpu_custom_call.1} parent=1 // pred_region
      _
    $region9: #{tpu_custom_call.1} parent=1 // pred_fallthru
      _
    // Predicated region
    $region10: #{tpu_custom_call.1} parent=1 // pred_check
      _
    $region11: #{tpu_custom_call.1} parent=1 // pred_check_branch
      %25 = sbr.rel (0) target = $region13
    $region12: #{tpu_custom_call.1} parent=1 // pred_region
      _
    $region13: #{tpu_custom_call.1} parent=1 // pred_fallthru
      _
    // Predicated region
    $region14: #{tpu_custom_call.1} parent=1 // pred_check
      _
    $region15: #{tpu_custom_call.1} parent=1 // pred_check_branch
      %27 = sbr.rel (0) target = $region17
    $region16: #{tpu_custom_call.1} parent=1 // pred_region
      %28 = dma.done [#allocation3], 256
    $region17: #{tpu_custom_call.1} parent=1 // pred_fallthru
      _
    %v29 = vld [vmem:[#allocation2] sm:$0xff]
    %v30 = vld [vmem:[#allocation2 + $0x8] sm:$0xff]
    %v31 = vld [vmem:[%s1] sm:$0x1]
    %v32 = vld [vmem:[%s2] sm:$0x1]
    %vm33 = vcmask 261120
    %v34 = vsel %vm33, %v29, 0.0
    %35 = vadd.xlane.f32.xlu0 %v34
    %v36 = vpop.xlane.xlu0 %35
    %v37 = vsel %vm33, %v30, 0.0
    %38 = vadd.xlane.f32.xlu0 %v37
    %v39 = vpop.xlane.xlu0 %38
    %v40 = vrcp.pop 32.0
    %v41 = vmul.f32 %v36, %v40
    %v42 = vmul.f32 %v39, %v40
    %v43 = vsub.f32 %v29, %v41
    %v44 = vsub.f32 %v30, %v42
    %v45 = vmul.f32 %v43, %v43
    %v46 = vmul.f32 %v44, %v44
    %v47 = vsel %vm33, %v45, 0.0
    %48 = vadd.xlane.f32.xlu0 %v47
    %v49 = vpop.xlane.xlu0 %48
    %v50 = vsel %vm33, %v46, 0.0
    %51 = vadd.xlane.f32.xlu0 %v50
    %v52 = vpop.xlane.xlu0 %51
    %v53 = vmul.f32 %v49, %v40
    %v54 = vmul.f32 %v52, %v40
    %v55 = vadd.f32 %v53, 1e-12
    %v56 = vadd.f32 %v54, 1e-12
    %v57 = vrsqrt.pop %v55
    %v58 = vrsqrt.pop %v56
    %v59 = vmul.f32 %v43, %v57
    %v60 = vmul.f32 %v44, %v58
    %v62 = vlaneseq
    %v63 = vshrl.u32 %v62, 7
    %v64 = vsub.s32 0, %v63
    %v65 = vrot.slane %v31, %v64
    %v67 = vmul.f32 %v59, %v65
    %v68 = vmul.f32 %v60, %v65
    %v70 = vlaneseq
    %v71 = vshrl.u32 %v70, 7
    %v72 = vsub.s32 0, %v71
    %v73 = vrot.slane %v32, %v72
    %v75 = vadd.f32 %v67, %v73
    %v76 = vadd.f32 %v68, %v73
    %77 = vst.msk [vmem:[#allocation5] sm:$0xff] %vm33, %v75
    %78 = vst.msk [vmem:[#allocation5 + $0x8] sm:$0xff] %vm33, %v76
    // Predicated region
    $region18: #{tpu_custom_call.1} parent=1 // pred_check
      _
    $region19: #{tpu_custom_call.1} parent=1 // pred_check_branch
      %80 = sbr.rel (0) target = $region21
    $region20: #{tpu_custom_call.1} parent=1 // pred_region
      %s82 = ssub.s32 256, 256
      %83 = vsyncadd [#allocation4], %s82
      %s84 = sshll.u32 [#allocation5], 4
      %s85 = int_to_ptr.vmem [resolvable:$true] %s84
      %90 = dma.vmem_to_hbm [thread:$0]  %s85, 256, %s3, [#allocation4], 128, 128, 8
    $region21: #{tpu_custom_call.1} parent=1 // pred_fallthru
      _
    // Predicated region
    $region22: #{tpu_custom_call.1} parent=1 // pred_check
      _
    $region23: #{tpu_custom_call.1} parent=1 // pred_check_branch
      %92 = sbr.rel (0) target = $region25
    $region24: #{tpu_custom_call.1} parent=1 // pred_region
      %93 = dma.done [#allocation4], 256
    $region25: #{tpu_custom_call.1} parent=1 // pred_fallthru
      _
    %94 = vsyncpa [#allocation3], 1
    %95 = vsyncpa [#allocation4], 1

</llo_original>
